<compile_context>
chip_gen: v7x
topology: tpu7x:2x2x1
jax: 0.10.0
libtpu: 0.0.40
codegen_flags: <defaults>
</compile_context>

<pallas_src>
import jax
import jax.numpy as jnp
from jax import lax
from jax.experimental import pallas as pl
from jax.experimental.pallas import tpu as pltpu


# ---------------------------------------------------------------------------
# Reference invPixelShuffle (NCHW) -- used only for the correctness check.
# ---------------------------------------------------------------------------
def inv_pixel_shuffle_ref(x, ratio=2):
    b, c, h, w = x.shape
    assert h % ratio == 0 and w % ratio == 0
    x = x.reshape(b, c, h // ratio, ratio, w // ratio, ratio)
    x = jnp.transpose(x, (0, 1, 3, 5, 2, 4))
    return x.reshape(b, c * ratio * ratio, h // ratio, w // ratio)


# ---------------------------------------------------------------------------
# Pallas kernel: 3x3 conv (stride 1, pad 1) on one batch element.
#   x_ref     : (H, W, Cin)      shuffled input, channels-last, unpadded
#   w_ref     : (Cout, 9*Cin)    weight, k = (dy*3+dx) major, ci minor
#   b_ref     : (Cout, 1)        bias
#   o_ref     : (Cout, H*W)      output (== flattened NCHW for this batch)
#   pad_ref   : (H+2, W+2, Cin)  VMEM scratch, zero halo built in-kernel
#   patch_ref : (H*W, 9*Cin)     VMEM scratch, im2col patch matrix
# ---------------------------------------------------------------------------
def conv3x3_kernel(x_ref, w_ref, b_ref, o_ref, pad_ref, patch_ref):
    H, W, Cin = x_ref.shape

    # Zero the padded scratch once (halo stays zero across grid iterations;
    # only the interior is ever rewritten below).
    @pl.when(pl.program_id(0) == 0)
    def _():
        pad_ref[...] = jnp.zeros_like(pad_ref)

    # In-kernel zero padding: copy the interior into the padded scratch.
    pad_ref[1:H + 1, 1:W + 1, :] = x_ref[...]

    # Build the im2col patch matrix:
    #   patch[(y*W + x), (dy*3 + dx)*Cin + ci] = pad[y + dy, x + dx, ci]
    for dy in range(3):
        for dx in range(3):
            k = dy * 3 + dx
            win = pad_ref[dy:dy + H, dx:dx + W, :]            # (H, W, Cin)
            patch_ref[:, k * Cin:(k + 1) * Cin] = win.reshape(H * W, Cin)

    # Single large-K MXU matmul: (Cout, 9*Cin) x (H*W, 9*Cin)^T -> (Cout, H*W).
    acc = lax.dot_general(
        w_ref[...], patch_ref[...],
        dimension_numbers=(((1,), (1,)), ((), ())),
        preferred_element_type=jnp.float32,
    )
    acc = acc + b_ref[...]                                    # (Cout, 1) bcast
    o_ref[...] = acc.astype(o_ref.dtype)


def conv3x3_pallas(x_sh_nhwc, w2, bias2):
    """x_sh_nhwc: (B, H, W, Cin); w2: (Cout, 9*Cin); bias2: (Cout, 1)."""
    B, H, W, Cin = x_sh_nhwc.shape
    Cout = w2.shape[0]

    out_flat = pl.pallas_call(
        conv3x3_kernel,
        out_shape=jax.ShapeDtypeStruct((B, Cout, H * W), x_sh_nhwc.dtype),
        grid_spec=pltpu.PrefetchScalarGridSpec(
            num_scalar_prefetch=0,
            grid=(B,),
            in_specs=[
                pl.BlockSpec((pl.Squeezed(), H, W, Cin),
                             lambda b: (b, 0, 0, 0)),
                pl.BlockSpec((Cout, 9 * Cin), lambda b: (0, 0)),
                pl.BlockSpec((Cout, 1), lambda b: (0, 0)),
            ],
            out_specs=pl.BlockSpec((pl.Squeezed(), Cout, H * W),
                                   lambda b: (b, 0, 0)),
            scratch_shapes=[
                pltpu.VMEM((H + 2, W + 2, Cin), x_sh_nhwc.dtype),
                pltpu.VMEM((H * W, 9 * Cin), x_sh_nhwc.dtype),
            ],
        ),
        compiler_params=pltpu.CompilerParams(
            dimension_semantics=("parallel",)),
    )(x_sh_nhwc, w2, bias2)
    return out_flat


# ---------------------------------------------------------------------------
# invUpsampler_module forward:
#   invPixelShuffle(2)  ->  Conv2d(4*n_feat -> n_feat, 3x3, stride 1, pad 1)
# ---------------------------------------------------------------------------
def inv_upsampler_forward(x_nchw, weight_oihw, bias, ratio=2):
    B, C, H, W = x_nchw.shape
    H2, W2 = H // ratio, W // ratio
    Cin = C * ratio * ratio
    Cout = weight_oihw.shape[0]

    # Fused invPixelShuffle + NCHW->NHWC: one transpose (reshapes are free).
    # shuffled_nhwc[b, y, x, c*4 + ry*2 + rx] = x[b, c, 2y+ry, 2x+rx]
    x6 = x_nchw.reshape(B, C, H2, ratio, W2, ratio)
    x_sh_nhwc = jnp.transpose(x6, (0, 2, 4, 1, 3, 5)).reshape(B, H2, W2, Cin)

    # Weight (Cout, Cin, 3, 3) -> (Cout, 9*Cin), k = dy*3+dx major, ci minor.
    w2 = jnp.transpose(weight_oihw, (0, 2, 3, 1)).reshape(Cout, 9 * Cin)
    b2 = bias.reshape(Cout, 1)

    out_flat = conv3x3_pallas(x_sh_nhwc, w2, b2)      # (B, Cout, H2*W2)
    # Kernel already emits flattened-NCHW blocks; this reshape is a bitcast.
    return out_flat.reshape(B, Cout, H2, W2)


if __name__ == "__main__":
    # Small shapes consistent with the module: n_feat=4, B=2, H=W=16.
    B, n_feat, H, W = 2, 4, 16, 16
    Cin_conv, Cout_conv = n_feat * 4, n_feat

    key = jax.random.PRNGKey(0)
    kx, kw, kb = jax.random.split(key, 3)
    x = jax.random.normal(kx, (B, n_feat, H, W), dtype=jnp.float32)

    # Deterministic Conv2d-style init: weight (Cout, Cin, 3, 3), bias (Cout,)
    fan_in = Cin_conv * 3 * 3
    bound = 1.0 / (fan_in ** 0.5)
    weight = jax.random.uniform(kw, (Cout_conv, Cin_conv, 3, 3),
                                minval=-bound, maxval=bound, dtype=jnp.float32)
    bias = jax.random.uniform(kb, (Cout_conv,),
                              minval=-bound, maxval=bound, dtype=jnp.float32)

    out = inv_upsampler_forward(x, weight, bias)
    out = jax.block_until_ready(out)
    assert out.shape == (B, n_feat, H // 2, W // 2), out.shape

    # Correctness check against XLA's conv on the shuffled input.
    x_sh = inv_pixel_shuffle_ref(x, 2)
    ref = lax.conv_general_dilated(
        x_sh, weight, window_strides=(1, 1), padding=((1, 1), (1, 1)),
        dimension_numbers=("NCHW", "OIHW", "NCHW")) + bias.reshape(1, -1, 1, 1)
    assert jnp.allclose(out, ref, atol=1e-4, rtol=1e-4), \
        float(jnp.max(jnp.abs(out - ref)))

    print("KERNEL_OK")
</pallas_src>

<mosaic_0001>
module attributes {stable_mosaic.version = 11 : i64} {
  func.func @conv3x3_kernel(%arg0: i32, %arg1: memref<1x8x8x16xf32, #tpu.memory_space<vmem>>, %arg2: memref<4x144xf32, #tpu.memory_space<vmem>>, %arg3: memref<4x1xf32, #tpu.memory_space<vmem>>, %arg4: memref<1x4x64xf32, #tpu.memory_space<vmem>>, %arg5: memref<10x10x16xf32, #tpu.memory_space<vmem>>, %arg6: memref<64x144xf32, #tpu.memory_space<vmem>>) attributes {dimension_semantics = [#tpu.dimension_semantics<parallel>], iteration_bounds = array<i64: 2>, scalar_prefetch = 0 : i64, scratch_operands = 2 : i64, tpu.core_type = #tpu.core_type<tc>, window_params = [{transform_indices = @transform_0, window_bounds = array<i64: 1, 8, 8, 16>}, {pipeline_mode = #tpu.pipeline_mode<synchronous>, transform_indices = @transform_1, window_bounds = array<i64: 4, 144>}, {pipeline_mode = #tpu.pipeline_mode<synchronous>, transform_indices = @transform_2, window_bounds = array<i64: 4, 1>}, {transform_indices = @transform_3, window_bounds = array<i64: 1, 4, 64>}]} {
    %c0_i32 = arith.constant 0 : i32
    %0 = arith.cmpi eq, %arg0, %c0_i32 : i32
    %1 = arith.extui %0 : i1 to i32
    %c0_i32_0 = arith.constant 0 : i32
    %2 = arith.cmpi ne, %1, %c0_i32_0 : i32
    scf.if %2 {
      %cst_51 = arith.constant 0.000000e+00 : f32
      %42 = vector.broadcast %cst_51 : f32 to vector<10x10x16xf32>
      %c0_52 = arith.constant 0 : index
      %c0_53 = arith.constant 0 : index
      %c0_54 = arith.constant 0 : index
      %43 = vector.load %arg5[%c0_52, %c0_53, %c0_54] : memref<10x10x16xf32, #tpu.memory_space<vmem>>, vector<10x10x16xf32>
      tpu.vector_store %arg5[%c0_52, %c0_53, %c0_54], %42 {strides = array<i32>} : memref<10x10x16xf32, #tpu.memory_space<vmem>>, vector<10x10x16xf32>,
    } else {
    }
    %c0 = arith.constant 0 : index
    %c0_1 = arith.constant 0 : index
    %c0_2 = arith.constant 0 : index
    %c0_3 = arith.constant 0 : index
    %3 = vector.load %arg1[%c0, %c0_1, %c0_2, %c0_3] : memref<1x8x8x16xf32, #tpu.memory_space<vmem>>, vector<1x8x8x16xf32>
    %4 = vector.shape_cast %3 : vector<1x8x8x16xf32> to vector<8x8x16xf32>
    %c1 = arith.constant 1 : index
    %c1_4 = arith.constant 1 : index
    %c0_5 = arith.constant 0 : index
    %5 = vector.load %arg5[%c1, %c1_4, %c0_5] : memref<10x10x16xf32, #tpu.memory_space<vmem>>, vector<8x8x16xf32>
    tpu.vector_store %arg5[%c1, %c1_4, %c0_5], %4 {strides = array<i32>} : memref<10x10x16xf32, #tpu.memory_space<vmem>>, vector<8x8x16xf32>,
    %c0_6 = arith.constant 0 : index
    %c0_7 = arith.constant 0 : index
    %c0_8 = arith.constant 0 : index
    %6 = vector.load %arg5[%c0_6, %c0_7, %c0_8] : memref<10x10x16xf32, #tpu.memory_space<vmem>>, vector<8x8x16xf32>
    %7 = vector.shape_cast %6 : vector<8x8x16xf32> to vector<64x16xf32>
    %c0_9 = arith.constant 0 : index
    %c0_10 = arith.constant 0 : index
    %8 = vector.load %arg6[%c0_9, %c0_10] : memref<64x144xf32, #tpu.memory_space<vmem>>, vector<64x16xf32>
    tpu.vector_store %arg6[%c0_9, %c0_10], %7 {strides = array<i32>} : memref<64x144xf32, #tpu.memory_space<vmem>>, vector<64x16xf32>,
    %c0_11 = arith.constant 0 : index
    %c1_12 = arith.constant 1 : index
    %c0_13 = arith.constant 0 : index
    %9 = vector.load %arg5[%c0_11, %c1_12, %c0_13] : memref<10x10x16xf32, #tpu.memory_space<vmem>>, vector<8x8x16xf32>
    %10 = vector.shape_cast %9 : vector<8x8x16xf32> to vector<64x16xf32>
    %c0_14 = arith.constant 0 : index
    %c16 = arith.constant 16 : index
    %11 = vector.load %arg6[%c0_14, %c16] : memref<64x144xf32, #tpu.memory_space<vmem>>, vector<64x16xf32>
    tpu.vector_store %arg6[%c0_14, %c16], %10 {strides = array<i32>} : memref<64x144xf32, #tpu.memory_space<vmem>>, vector<64x16xf32>,
    %c0_15 = arith.constant 0 : index
    %c2 = arith.constant 2 : index
    %c0_16 = arith.constant 0 : index
    %12 = vector.load %arg5[%c0_15, %c2, %c0_16] : memref<10x10x16xf32, #tpu.memory_space<vmem>>, vector<8x8x16xf32>
    %13 = vector.shape_cast %12 : vector<8x8x16xf32> to vector<64x16xf32>
    %c0_17 = arith.constant 0 : index
    %c32 = arith.constant 32 : index
    %14 = vector.load %arg6[%c0_17, %c32] : memref<64x144xf32, #tpu.memory_space<vmem>>, vector<64x16xf32>
    tpu.vector_store %arg6[%c0_17, %c32], %13 {strides = array<i32>} : memref<64x144xf32, #tpu.memory_space<vmem>>, vector<64x16xf32>,
    %c1_18 = arith.constant 1 : index
    %c0_19 = arith.constant 0 : index
    %c0_20 = arith.constant 0 : index
    %15 = vector.load %arg5[%c1_18, %c0_19, %c0_20] : memref<10x10x16xf32, #tpu.memory_space<vmem>>, vector<8x8x16xf32>
    %16 = vector.shape_cast %15 : vector<8x8x16xf32> to vector<64x16xf32>
    %c0_21 = arith.constant 0 : index
    %c48 = arith.constant 48 : index
    %17 = vector.load %arg6[%c0_21, %c48] : memref<64x144xf32, #tpu.memory_space<vmem>>, vector<64x16xf32>
    tpu.vector_store %arg6[%c0_21, %c48], %16 {strides = array<i32>} : memref<64x144xf32, #tpu.memory_space<vmem>>, vector<64x16xf32>,
    %c1_22 = arith.constant 1 : index
    %c1_23 = arith.constant 1 : index
    %c0_24 = arith.constant 0 : index
    %18 = vector.load %arg5[%c1_22, %c1_23, %c0_24] : memref<10x10x16xf32, #tpu.memory_space<vmem>>, vector<8x8x16xf32>
    %19 = vector.shape_cast %18 : vector<8x8x16xf32> to vector<64x16xf32>
    %c0_25 = arith.constant 0 : index
    %c64 = arith.constant 64 : index
    %20 = vector.load %arg6[%c0_25, %c64] : memref<64x144xf32, #tpu.memory_space<vmem>>, vector<64x16xf32>
    tpu.vector_store %arg6[%c0_25, %c64], %19 {strides = array<i32>} : memref<64x144xf32, #tpu.memory_space<vmem>>, vector<64x16xf32>,
    %c1_26 = arith.constant 1 : index
    %c2_27 = arith.constant 2 : index
    %c0_28 = arith.constant 0 : index
    %21 = vector.load %arg5[%c1_26, %c2_27, %c0_28] : memref<10x10x16xf32, #tpu.memory_space<vmem>>, vector<8x8x16xf32>
    %22 = vector.shape_cast %21 : vector<8x8x16xf32> to vector<64x16xf32>
    %c0_29 = arith.constant 0 : index
    %c80 = arith.constant 80 : index
    %23 = vector.load %arg6[%c0_29, %c80] : memref<64x144xf32, #tpu.memory_space<vmem>>, vector<64x16xf32>
    tpu.vector_store %arg6[%c0_29, %c80], %22 {strides = array<i32>} : memref<64x144xf32, #tpu.memory_space<vmem>>, vector<64x16xf32>,
    %c2_30 = arith.constant 2 : index
    %c0_31 = arith.constant 0 : index
    %c0_32 = arith.constant 0 : index
    %24 = vector.load %arg5[%c2_30, %c0_31, %c0_32] : memref<10x10x16xf32, #tpu.memory_space<vmem>>, vector<8x8x16xf32>
    %25 = vector.shape_cast %24 : vector<8x8x16xf32> to vector<64x16xf32>
    %c0_33 = arith.constant 0 : index
    %c96 = arith.constant 96 : index
    %26 = vector.load %arg6[%c0_33, %c96] : memref<64x144xf32, #tpu.memory_space<vmem>>, vector<64x16xf32>
    tpu.vector_store %arg6[%c0_33, %c96], %25 {strides = array<i32>} : memref<64x144xf32, #tpu.memory_space<vmem>>, vector<64x16xf32>,
    %c2_34 = arith.constant 2 : index
    %c1_35 = arith.constant 1 : index
    %c0_36 = arith.constant 0 : index
    %27 = vector.load %arg5[%c2_34, %c1_35, %c0_36] : memref<10x10x16xf32, #tpu.memory_space<vmem>>, vector<8x8x16xf32>
    %28 = vector.shape_cast %27 : vector<8x8x16xf32> to vector<64x16xf32>
    %c0_37 = arith.constant 0 : index
    %c112 = arith.constant 112 : index
    %29 = vector.load %arg6[%c0_37, %c112] : memref<64x144xf32, #tpu.memory_space<vmem>>, vector<64x16xf32>
    tpu.vector_store %arg6[%c0_37, %c112], %28 {strides = array<i32>} : memref<64x144xf32, #tpu.memory_space<vmem>>, vector<64x16xf32>,
    %c2_38 = arith.constant 2 : index
    %c2_39 = arith.constant 2 : index
    %c0_40 = arith.constant 0 : index
    %30 = vector.load %arg5[%c2_38, %c2_39, %c0_40] : memref<10x10x16xf32, #tpu.memory_space<vmem>>, vector<8x8x16xf32>
    %31 = vector.shape_cast %30 : vector<8x8x16xf32> to vector<64x16xf32>
    %c0_41 = arith.constant 0 : index
    %c128 = arith.constant 128 : index
    %32 = vector.load %arg6[%c0_41, %c128] : memref<64x144xf32, #tpu.memory_space<vmem>>, vector<64x16xf32>
    tpu.vector_store %arg6[%c0_41, %c128], %31 {strides = array<i32>} : memref<64x144xf32, #tpu.memory_space<vmem>>, vector<64x16xf32>,
    %c0_42 = arith.constant 0 : index
    %c0_43 = arith.constant 0 : index
    %33 = vector.load %arg2[%c0_42, %c0_43] : memref<4x144xf32, #tpu.memory_space<vmem>>, vector<4x144xf32>
    %c0_44 = arith.constant 0 : index
    %c0_45 = arith.constant 0 : index
    %34 = vector.load %arg6[%c0_44, %c0_45] : memref<64x144xf32, #tpu.memory_space<vmem>>, vector<64x144xf32>
    %cst = arith.constant dense<0.000000e+00> : vector<4x64xf32>
    %35 = tpu.matmul %33, %34, %cst {dimension_numbers = #tpu.dot_dimension_numbers<[1], [1], [0], [0], [0, 0, 1, 0], [], []>} : vector<4x144xf32>, vector<64x144xf32>, vector<4x64xf32> -> vector<4x64xf32>
    %c0_46 = arith.constant 0 : index
    %c0_47 = arith.constant 0 : index
    %36 = vector.load %arg3[%c0_46, %c0_47] : memref<4x1xf32, #tpu.memory_space<vmem>>, vector<4x1xf32>
    %37 = vector.broadcast %36 : vector<4x1xf32> to vector<4x64xf32>
    %38 = arith.addf %35, %37 : vector<4x64xf32>
    %c0_48 = arith.constant 0 : index
    %c0_49 = arith.constant 0 : index
    %c0_50 = arith.constant 0 : index
    %39 = vector.load %arg4[%c0_48, %c0_49, %c0_50] : memref<1x4x64xf32, #tpu.memory_space<vmem>>, vector<1x4x64xf32>
    %40 = vector.shape_cast %39 : vector<1x4x64xf32> to vector<4x64xf32>
    %41 = vector.shape_cast %38 : vector<4x64xf32> to vector<1x4x64xf32>
    tpu.vector_store %arg4[%c0_48, %c0_49, %c0_50], %41 {strides = array<i32>} : memref<1x4x64xf32, #tpu.memory_space<vmem>>, vector<1x4x64xf32>,
    return
  }
  func.func @transform_0(%arg0: i32) -> (i32, i32, i32, i32) {
    %c0_i32 = arith.constant 0 : i32
    %c0_i32_0 = arith.constant 0 : i32
    %c0_i32_1 = arith.constant 0 : i32
    %c0_i32_2 = arith.constant 0 : i32
    return %arg0, %c0_i32, %c0_i32_0, %c0_i32_1 : i32, i32, i32, i32
  }
  func.func @transform_1(%arg0: i32) -> (i32, i32) {
    %c0_i32 = arith.constant 0 : i32
    %c0_i32_0 = arith.constant 0 : i32
    %c0_i32_1 = arith.constant 0 : i32
    return %c0_i32, %c0_i32_0 : i32, i32
  }
  func.func @transform_2(%arg0: i32) -> (i32, i32) {
    %c0_i32 = arith.constant 0 : i32
    %c0_i32_0 = arith.constant 0 : i32
    %c0_i32_1 = arith.constant 0 : i32
    return %c0_i32, %c0_i32_0 : i32, i32
  }
  func.func @transform_3(%arg0: i32) -> (i32, i32, i32) {
    %c0_i32 = arith.constant 0 : i32
    %c0_i32_0 = arith.constant 0 : i32
    %c0_i32_1 = arith.constant 0 : i32
    return %arg0, %c0_i32, %c0_i32_0 : i32, i32, i32
  }
}

</mosaic_0001>

<llo_original>
// kernel: tpu_custom_call.1
$region0: #{tpu_custom_call.1}
  #allocation0 [shape = 'u32[]', space=smem, size = 0x4, offset = 0x4, fixed_abs, tag = 'smem constant byte address 0x4 - core index']
  #allocation1 [shape = 'u32[144,128]{1,0:T(1,128)}', space=vmem, size = 0x12000, scoped, tag = 'internal scratch']
  #allocation2 [shape = 'f32[10,10,16]{2,1,0:T(8,128)}', space=vmem, size = 0x14000, scoped, tag = 'scratch operand']
  #allocation3 [shape = 'f32[64,144]{1,0:T(8,128)}', space=vmem, size = 0x10000, scoped, tag = 'scratch operand']
  %s0 = inlined_call_operand.hbm [shape: f32[2,8,8,16], index: 0, kind: input, shape index: {}]
  %s1 = inlined_call_operand.vmem [shape: f32[4,144], index: 1, kind: input, shape index: {}]
  %s2 = inlined_call_operand.vmem [shape: f32[4,1], index: 2, kind: input, shape index: {}]
  %s3 = inlined_call_operand.hbm [shape: f32[2,4,64], index: 3, kind: output, shape index: {}]
  %s4 = sld [smem:[#allocation0]]
  $region53: #{tpu_custom_call.1} parent=0
    _
  %s6 = ssub.s32 1, %s4
  %s7 = scalar_select 0, %s6, %s4
  $region1: #{tpu_custom_call.1} parent=0
    #allocation4 [shape = 'u8[65536]{0}', space=vmem, size = 0x10000, scoped, tag = 'input window, operand 0']
    #allocation5 [shape = 's32[2]{0}', space=sflag, size = 0x8, scoped, tag = 'scoped memory for tpu_custom_call.1']
    #allocation6 [shape = 's32[2]{0}', space=sflag, size = 0x8, scoped, tag = 'scoped memory for tpu_custom_call.1']
    #allocation7 [shape = 'u8[4096]{0}', space=vmem, size = 0x1000, scoped, tag = 'output window, operand 0']
    %8 = vsyncpa [#allocation5], 0
    %s9 = scalar_lea.sflag [#allocation5], 1
    %10 = vsyncpa %s9, 0
    %11 = vsyncpa [#allocation6], 0
    %s12 = scalar_lea.sflag [#allocation6], 1
    %13 = vsyncpa %s12, 0
    loop: start=0, step=1, limit=4
    $region2: #{tpu_custom_call.1} parent=1 // loop_pre_header
      _
    $region3: #{tpu_custom_call.1} parent=1 // loop_header
      %s15 = sphi 0, %s19
      %p16 = scmp.ge.s32.totalorder %s15, 4
      %s25 = sphi 0, %s27
      %s28 = sphi 0, %s25
      %s29 = sphi 0, %s28
      %s45 = sphi 0, %s29
      %s49 = sphi 0, %s49
      %s51 = sphi 0, %s49
      %s52 = sphi 0, %s51
      %s66 = sphi 0, %s52
      %s70 = sphi 0, %s70
      %s72 = sphi 0, %s70
      %s73 = sphi 0, %s72
      %s87 = sphi 0, %s73
      %s93 = sphi 0, %s95
      %s96 = sphi 0, %s93
      %s97 = sphi 0, %s96
      %s113 = sphi 0, %s97
    $region4: #{tpu_custom_call.1} parent=1 // loop_header_branch
      %18 = sbr.rel (%p16) target = $region8
    $region5: #{tpu_custom_call.1} parent=1 // loop_body
      %s20 = ssub.s32 %s15, 1
      %s21 = ssub.s32 %s15, 2
      %s22 = sadd.s32 %s15, 1
      %s23 = ssub.s32 %s15, %s22
      %p24 = scmp.eq.s32.totalorder %s23, 0
      %s26 = sadd.s32 %s25, 1
      %s27 = scalar_select %p24, %s25, %s26
      %p30 = pneg %p24
      %p31 = scmp.eq.s32.totalorder %s15, 1
      %p32 = por %p30, %p31
      %p33 = scmp.ne.s32.totalorder %s25, %s28
      %p34 = scmp.eq.s32.totalorder %s15, 0
      %p35 = por %p33, %p34
      %p36 = scmp.ne.s32.totalorder %s25, %s28
      %p37 = scmp.eq.s32.totalorder %s20, 1
      %p38 = por %p36, %p37
      %p39 = scmp.ne.s32.totalorder %s28, %s29
      %p40 = scmp.eq.s32.totalorder %s20, 0
      %p41 = por %p39, %p40
      %p42 = scmp.ne.s32.totalorder %s28, %s29
      %p43 = scmp.eq.s32.totalorder %s21, 1
      %p44 = por %p42, %p43
      %p46 = scmp.ne.s32.totalorder %s29, %s45
      %p47 = scmp.eq.s32.totalorder %s21, 0
      %p48 = por %p46, %p47
      %s50 = sadd.s32 %s49, 1
      %p53 = scmp.eq.s32.totalorder %s15, 1
      %p54 = scmp.ne.s32.totalorder %s49, %s51
      %p55 = scmp.eq.s32.totalorder %s15, 0
      %p56 = por %p54, %p55
      %p57 = scmp.ne.s32.totalorder %s49, %s51
      %p58 = scmp.eq.s32.totalorder %s20, 1
      %p59 = por %p57, %p58
      %p60 = scmp.ne.s32.totalorder %s51, %s52
      %p61 = scmp.eq.s32.totalorder %s20, 0
      %p62 = por %p60, %p61
      %p63 = scmp.ne.s32.totalorder %s51, %s52
      %p64 = scmp.eq.s32.totalorder %s21, 1
      %p65 = por %p63, %p64
      %p67 = scmp.ne.s32.totalorder %s52, %s66
      %p68 = scmp.eq.s32.totalorder %s21, 0
      %p69 = por %p67, %p68
      %s71 = sadd.s32 %s70, 1
      %p74 = scmp.eq.s32.totalorder %s15, 1
      %p75 = scmp.ne.s32.totalorder %s70, %s72
      %p76 = scmp.eq.s32.totalorder %s15, 0
      %p77 = por %p75, %p76
      %p78 = scmp.ne.s32.totalorder %s70, %s72
      %p79 = scmp.eq.s32.totalorder %s20, 1
      %p80 = por %p78, %p79
      %p81 = scmp.ne.s32.totalorder %s72, %s73
      %p82 = scmp.eq.s32.totalorder %s20, 0
      %p83 = por %p81, %p82
      %p84 = scmp.ne.s32.totalorder %s72, %s73
      %p85 = scmp.eq.s32.totalorder %s21, 1
      %p86 = por %p84, %p85
      %p88 = scmp.ne.s32.totalorder %s73, %s87
      %p89 = scmp.eq.s32.totalorder %s21, 0
      %p90 = por %p88, %p89
      %s91 = ssub.s32 %s15, %s22
      %p92 = scmp.eq.s32.totalorder %s91, 0
      %s94 = sadd.s32 %s93, 1
      %s95 = scalar_select %p92, %s93, %s94
      %p98 = pneg %p92
      %p99 = scmp.eq.s32.totalorder %s15, 1
      %p100 = por %p98, %p99
      %p101 = scmp.ne.s32.totalorder %s93, %s96
      %p102 = scmp.eq.s32.totalorder %s15, 0
      %p103 = por %p101, %p102
      %p104 = scmp.ne.s32.totalorder %s93, %s96
      %p105 = scmp.eq.s32.totalorder %s20, 1
      %p106 = por %p104, %p105
      %p107 = scmp.ne.s32.totalorder %s96, %s97
      %p108 = scmp.eq.s32.totalorder %s20, 0
      %p109 = por %p107, %p108
      %p110 = scmp.ne.s32.totalorder %s96, %s97
      %p111 = scmp.eq.s32.totalorder %s21, 1
      %p112 = por %p110, %p111
      %p114 = scmp.ne.s32.totalorder %s97, %s113
      %p115 = scmp.eq.s32.totalorder %s21, 0
      %p116 = por %p114, %p115
      %p117 = scmp.le.s32.totalorder 1, %s15
      %p118 = scmp.lt.s32.totalorder %s15, 3
      %p119 = pnand %p117, %p118
      %p120 = pneg %p119
      // Predicated region
      $region9: #{tpu_custom_call.1} parent=5 // pred_check
        _
      $region10: #{tpu_custom_call.1} parent=5 // pred_check_branch
        %122 = sbr.rel (%p119) target = $region12
      $region11: #{tpu_custom_call.1} parent=5 // pred_region
        %s123 = ssub.s32 %s15, 1
        // Predicated region
        $region13: #{tpu_custom_call.1} parent=11 // pred_check
          %p124 = pneg %p62
        $region14: #{tpu_custom_call.1} parent=11 // pred_check_branch
          %126 = sbr.rel (%p124) target = $region16
        $region15: #{tpu_custom_call.1} parent=11 // pred_region
          _
        $region16: #{tpu_custom_call.1} parent=11 // pred_fallthru
          _
        // Predicated region
        $region17: #{tpu_custom_call.1} parent=11 // pred_check
          %p127 = pneg %p83
        $region18: #{tpu_custom_call.1} parent=11 // pred_check_branch
          %129 = sbr.rel (%p127) target = $region20
        $region19: #{tpu_custom_call.1} parent=11 // pred_region
          _
        $region20: #{tpu_custom_call.1} parent=11 // pred_fallthru
          _
      $region12: #{tpu_custom_call.1} parent=5 // pred_fallthru
        _
      %p130 = scmp.lt.s32.totalorder %s15, 2
      // Predicated region
      $region21: #{tpu_custom_call.1} parent=5 // pred_check
        %p131 = pneg %p130
      $region22: #{tpu_custom_call.1} parent=5 // pred_check_branch
        %133 = sbr.rel (%p131) target = $region24
      $region23: #{tpu_custom_call.1} parent=5 // pred_region
        // Predicated region
        $region25: #{tpu_custom_call.1} parent=23 // pred_check
          %p134 = pneg %p35
        $region26: #{tpu_custom_call.1} parent=23 // pred_check_branch
          %136 = sbr.rel (%p134) target = $region28
        $region27: #{tpu_custom_call.1} parent=23 // pred_region
          %s137 = sand.u32 %s25, 1
          %s138 = scalar_lea.sflag [#allocation5], %s137
          %s139 = sand.u32 %s25, 1
          %s140 = smul.addr %s139, 64
          %s141 = scalar_lea.vmem [#allocation4], %s140
          %s143 = ssub.s32 1024, 1024
          %144 = vsyncadd %s138, %s143
          %s145 = smul.addr %s15, 8
          %s146 = smul.addr %s145, 128
          %s147 = scalar_lea.hbm %s0, %s146
          %s148 = sshll.u32 %s141, 4
          %s149 = int_to_ptr.vmem [resolvable:$true] %s148
          %154 = dma.hbm_to_vmem [thread:$0]  %s147, 1024, %s149, %s138, 128, 128, 8
        $region28: #{tpu_custom_call.1} parent=23 // pred_fallthru
          _
      $region24: #{tpu_custom_call.1} parent=5 // pred_fallthru
        _
      %p155 = scmp.le.s32.totalorder 1, %s15
      %p156 = scmp.lt.s32.totalorder %s15, 3
      %p157 = pnand %p155, %p156
      %p158 = pneg %p157
      // Predicated region
      $region29: #{tpu_custom_call.1} parent=5 // pred_check
        _
      $region30: #{tpu_custom_call.1} parent=5 // pred_check_branch
        %160 = sbr.rel (%p157) target = $region32
      $region31: #{tpu_custom_call.1} parent=5 // pred_region
        %s161 = ssub.s32 %s15, 1
        %s162 = sand.u32 %s28, 1
        %s163 = scalar_lea.sflag [#allocation5], %s162
        %s164 = sand.u32 %s28, 1
        %s165 = smul.addr %s164, 64
        %s166 = scalar_lea.vmem [#allocation4], %s165
        // Predicated region
        $region33: #{tpu_custom_call.1} parent=31 // pred_check
          %p167 = pneg %p41
        $region34: #{tpu_custom_call.1} parent=31 // pred_check_branch
          %169 = sbr.rel (%p167) target = $region36
        $region35: #{tpu_custom_call.1} parent=31 // pred_region
          %170 = dma.done %s163, 1024
        $region36: #{tpu_custom_call.1} parent=31 // pred_fallthru
          _
        %s171 = sand.u32 %s28, 1
        %s172 = scalar_lea.sflag [#allocation5], %s171
        %s173 = sand.u32 %s28, 1
        %s174 = smul.addr %s173, 64
        %s175 = scalar_lea.vmem [#allocation4], %s174
        %p176 = pneg %p41
        %p177 = pneg %p38
        %p178 = pneg %p62
        %p179 = pneg %p59
        %p180 = pneg %p83
        %p181 = pneg %p80
        %p182 = pneg %p109
        %p183 = pneg %p106
        %s184 = sand.u32 %s96, 1
        %s185 = scalar_lea.sflag [#allocation6], %s184
        %s186 = sand.u32 %s96, 1
        %s187 = smul.addr %s186, 4
        %s188 = scalar_lea.vmem [#allocation7], %s187
        %p189 = scmp.eq.s32.totalorder %s20, 0
        // Predicated region
        $region37: #{tpu_custom_call.1} parent=31 // pred_check
          %p190 = pneg %p189
        $region38: #{tpu_custom_call.1} parent=31 // pred_check_branch
          %192 = sbr.rel (%p190) target = $region40
        $region39: #{tpu_custom_call.1} parent=31 // pred_region
          %vm193 = vcmask 130048
          %194 = vst.msk [vmem:[#allocation2] sm:$0xff] %vm193, 0.0
          %vm195 = vcmask 123904
          %196 = vst.msk [vmem:[#allocation2 + $0x8] sm:$0x3] %vm195, 0.0
          %197 = vst.msk [vmem:[#allocation2 + $0x10] sm:$0xff] %vm193, 0.0
          %198 = vst.msk [vmem:[#allocation2 + $0x18] sm:$0x3] %vm195, 0.0
          %199 = vst.msk [vmem:[#allocation2 + $0x20] sm:$0xff] %vm193, 0.0
          %200 = vst.msk [vmem:[#allocation2 + $0x28] sm:$0x3] %vm195, 0.0
          %201 = vst.msk [vmem:[#allocation2 + $0x30] sm:$0xff] %vm193, 0.0
          %202 = vst.msk [vmem:[#allocation2 + $0x38] sm:$0x3] %vm195, 0.0
          %203 = vst.msk [vmem:[#allocation2 + $0x40] sm:$0xff] %vm193, 0.0
          %204 = vst.msk [vmem:[#allocation2 + $0x48] sm:$0x3] %vm195, 0.0
          %205 = vst.msk [vmem:[#allocation2 + $0x50] sm:$0xff] %vm193, 0.0
          %206 = vst.msk [vmem:[#allocation2 + $0x58] sm:$0x3] %vm195, 0.0
          %207 = vst.msk [vmem:[#allocation2 + $0x60] sm:$0xff] %vm193, 0.0
          %208 = vst.msk [vmem:[#allocation2 + $0x68] sm:$0x3] %vm195, 0.0
          %209 = vst.msk [vmem:[#allocation2 + $0x70] sm:$0xff] %vm193, 0.0
          %210 = vst.msk [vmem:[#allocation2 + $0x78] sm:$0x3] %vm195, 0.0
          %211 = vst.msk [vmem:[#allocation2 + $0x80] sm:$0xff] %vm193, 0.0
          %212 = vst.msk [vmem:[#allocation2 + $0x88] sm:$0x3] %vm195, 0.0
          %213 = vst.msk [vmem:[#allocation2 + $0x90] sm:$0xff] %vm193, 0.0
          %214 = vst.msk [vmem:[#allocation2 + $0x98] sm:$0x3] %vm195, 0.0
        $region40: #{tpu_custom_call.1} parent=31 // pred_fallthru
          _
        %v215 = vld [vmem:[%s166] sm:$0xff]
        %v216 = vld [vmem:[%s166 + $0x8] sm:$0xff]
        %v217 = vld [vmem:[%s166 + $0x10] sm:$0xff]
        %v218 = vld [vmem:[%s166 + $0x18] sm:$0xff]
        %v219 = vld [vmem:[%s166 + $0x20] sm:$0xff]
        %v220 = vld [vmem:[%s166 + $0x28] sm:$0xff]
        %v221 = vld [vmem:[%s166 + $0x30] sm:$0xff]
        %v222 = vld [vmem:[%s166 + $0x38] sm:$0xff]
        %s223 = scalar_lea.vmem [#allocation2], 16
        %vm224 = vcmask 130048
        %225 = vst.msk [vmem:[%s223 + $0x1] sm:$0xff] %vm224, %v215
        %226 = vst.msk [vmem:[%s223 + $0x11] sm:$0xff] %vm224, %v216
        %227 = vst.msk [vmem:[%s223 + $0x21] sm:$0xff] %vm224, %v217
        %228 = vst.msk [vmem:[%s223 + $0x31] sm:$0xff] %vm224, %v218
        %229 = vst.msk [vmem:[%s223 + $0x41] sm:$0xff] %vm224, %v219
        %230 = vst.msk [vmem:[%s223 + $0x51] sm:$0xff] %vm224, %v220
        %231 = vst.msk [vmem:[%s223 + $0x61] sm:$0xff] %vm224, %v221
        %232 = vst.msk [vmem:[%s223 + $0x71] sm:$0xff] %vm224, %v222
        %v233 = vld [vmem:[#allocation2] sm:$0xff]
        %v234 = vld [vmem:[#allocation2 + $0x10] sm:$0xff]
        %v235 = vld [vmem:[#allocation2 + $0x20] sm:$0xff]
        %v236 = vld [vmem:[#allocation2 + $0x30] sm:$0xff]
        %v237 = vld [vmem:[#allocation2 + $0x40] sm:$0xff]
        %v238 = vld [vmem:[#allocation2 + $0x50] sm:$0xff]
        %v239 = vld [vmem:[#allocation2 + $0x60] sm:$0xff]
        %v240 = vld [vmem:[#allocation2 + $0x70] sm:$0xff]
        %241 = vst.msk [vmem:[#allocation3] sm:$0xff] %vm224, %v233
        %242 = vst.msk [vmem:[#allocation3 + $0x10] sm:$0xff] %vm224, %v234
        %243 = vst.msk [vmem:[#allocation3 + $0x20] sm:$0xff] %vm224, %v235
        %244 = vst.msk [vmem:[#allocation3 + $0x30] sm:$0xff] %vm224, %v236
        %245 = vst.msk [vmem:[#allocation3 + $0x40] sm:$0xff] %vm224, %v237
        %246 = vst.msk [vmem:[#allocation3 + $0x50] sm:$0xff] %vm224, %v238
        %247 = vst.msk [vmem:[#allocation3 + $0x60] sm:$0xff] %vm224, %v239
        %248 = vst.msk [vmem:[#allocation3 + $0x70] sm:$0xff] %vm224, %v240
        %v249 = vld [vmem:[#allocation2 + $0x1] sm:$0xff]
        %v250 = vld [vmem:[#allocation2 + $0x11] sm:$0xff]
        %v251 = vld [vmem:[#allocation2 + $0x21] sm:$0xff]
        %v252 = vld [vmem:[#allocation2 + $0x31] sm:$0xff]
        %v253 = vld [vmem:[#allocation2 + $0x41] sm:$0xff]
        %v254 = vld [vmem:[#allocation2 + $0x51] sm:$0xff]
        %v255 = vld [vmem:[#allocation2 + $0x61] sm:$0xff]
        %v256 = vld [vmem:[#allocation2 + $0x71] sm:$0xff]
        %265 = vrot.lane.b32.xlu0 %v249, 16
        %v266 = vpop.permute.xlu0 %265
        %267 = vrot.lane.b32.xlu0 %v250, 16
        %v268 = vpop.permute.xlu0 %267
        %269 = vrot.lane.b32.xlu0 %v251, 16
        %v270 = vpop.permute.xlu0 %269
        %271 = vrot.lane.b32.xlu0 %v252, 16
        %v272 = vpop.permute.xlu0 %271
        %273 = vrot.lane.b32.xlu0 %v253, 16
        %v274 = vpop.permute.xlu0 %273
        %275 = vrot.lane.b32.xlu0 %v254, 16
        %v276 = vpop.permute.xlu0 %275
        %277 = vrot.lane.b32.xlu0 %v255, 16
        %v278 = vpop.permute.xlu0 %277
        %279 = vrot.lane.b32.xlu0 %v256, 16
        %v280 = vpop.permute.xlu0 %279
        %vm289 = vcmask 261248
        %290 = vst.msk [vmem:[#allocation3] sm:$0xff] %vm289, %v266
        %291 = vst.msk [vmem:[#allocation3 + $0x10] sm:$0xff] %vm289, %v268
        %292 = vst.msk [vmem:[#allocation3 + $0x20] sm:$0xff] %vm289, %v270
        %293 = vst.msk [vmem:[#allocation3 + $0x30] sm:$0xff] %vm289, %v272
        %294 = vst.msk [vmem:[#allocation3 + $0x40] sm:$0xff] %vm289, %v274
        %295 = vst.msk [vmem:[#allocation3 + $0x50] sm:$0xff] %vm289, %v276
        %296 = vst.msk [vmem:[#allocation3 + $0x60] sm:$0xff] %vm289, %v278
        %297 = vst.msk [vmem:[#allocation3 + $0x70] sm:$0xff] %vm289, %v280
        %v298 = vld [vmem:[#allocation2 + $0x2] sm:$0xff]
        %v299 = vld [vmem:[#allocation2 + $0x12] sm:$0xff]
        %v300 = vld [vmem:[#allocation2 + $0x22] sm:$0xff]
        %v301 = vld [vmem:[#allocation2 + $0x32] sm:$0xff]
        %v302 = vld [vmem:[#allocation2 + $0x42] sm:$0xff]
        %v303 = vld [vmem:[#allocation2 + $0x52] sm:$0xff]
        %v304 = vld [vmem:[#allocation2 + $0x62] sm:$0xff]
        %v305 = vld [vmem:[#allocation2 + $0x72] sm:$0xff]
        %314 = vrot.lane.b32.xlu0 %v298, 32
        %v315 = vpop.permute.xlu0 %314
        %316 = vrot.lane.b32.xlu0 %v299, 32
        %v317 = vpop.permute.xlu0 %316
        %318 = vrot.lane.b32.xlu0 %v300, 32
        %v319 = vpop.permute.xlu0 %318
        %320 = vrot.lane.b32.xlu0 %v301, 32
        %v321 = vpop.permute.xlu0 %320
        %322 = vrot.lane.b32.xlu0 %v302, 32
        %v323 = vpop.permute.xlu0 %322
        %324 = vrot.lane.b32.xlu0 %v303, 32
        %v325 = vpop.permute.xlu0 %324
        %326 = vrot.lane.b32.xlu0 %v304, 32
        %v327 = vpop.permute.xlu0 %326
        %328 = vrot.lane.b32.xlu0 %v305, 32
        %v329 = vpop.permute.xlu0 %328
        %vm338 = vcmask 392448
        %339 = vst.msk [vmem:[#allocation3] sm:$0xff] %vm338, %v315
        %340 = vst.msk [vmem:[#allocation3 + $0x10] sm:$0xff] %vm338, %v317
        %341 = vst.msk [vmem:[#allocation3 + $0x20] sm:$0xff] %vm338, %v319
        %342 = vst.msk [vmem:[#allocation3 + $0x30] sm:$0xff] %vm338, %v321
        %343 = vst.msk [vmem:[#allocation3 + $0x40] sm:$0xff] %vm338, %v323
        %344 = vst.msk [vmem:[#allocation3 + $0x50] sm:$0xff] %vm338, %v325
        %345 = vst.msk [vmem:[#allocation3 + $0x60] sm:$0xff] %vm338, %v327
        %346 = vst.msk [vmem:[#allocation3 + $0x70] sm:$0xff] %vm338, %v329
        %v347 = vld [vmem:[%s223] sm:$0xff]
        %v348 = vld [vmem:[%s223 + $0x10] sm:$0xff]
        %v349 = vld [vmem:[%s223 + $0x20] sm:$0xff]
        %v350 = vld [vmem:[%s223 + $0x30] sm:$0xff]
        %v351 = vld [vmem:[%s223 + $0x40] sm:$0xff]
        %v352 = vld [vmem:[%s223 + $0x50] sm:$0xff]
        %v353 = vld [vmem:[%s223 + $0x60] sm:$0xff]
        %v354 = vld [vmem:[%s223 + $0x70] sm:$0xff]
        %363 = vrot.lane.b32.xlu0 %v347, 48
        %v364 = vpop.permute.xlu0 %363
        %365 = vrot.lane.b32.xlu0 %v348, 48
        %v366 = vpop.permute.xlu0 %365
        %367 = vrot.lane.b32.xlu0 %v349, 48
        %v368 = vpop.permute.xlu0 %367
        %369 = vrot.lane.b32.xlu0 %v350, 48
        %v370 = vpop.permute.xlu0 %369
        %371 = vrot.lane.b32.xlu0 %v351, 48
        %v372 = vpop.permute.xlu0 %371
        %373 = vrot.lane.b32.xlu0 %v352, 48
        %v374 = vpop.permute.xlu0 %373
        %375 = vrot.lane.b32.xlu0 %v353, 48
        %v376 = vpop.permute.xlu0 %375
        %377 = vrot.lane.b32.xlu0 %v354, 48
        %v378 = vpop.permute.xlu0 %377
        %vm387 = vcmask 523648
        %388 = vst.msk [vmem:[#allocation3] sm:$0xff] %vm387, %v364
        %389 = vst.msk [vmem:[#allocation3 + $0x10] sm:$0xff] %vm387, %v366
        %390 = vst.msk [vmem:[#allocation3 + $0x20] sm:$0xff] %vm387, %v368
        %391 = vst.msk [vmem:[#allocation3 + $0x30] sm:$0xff] %vm387, %v370
        %392 = vst.msk [vmem:[#allocation3 + $0x40] sm:$0xff] %vm387, %v372
        %393 = vst.msk [vmem:[#allocation3 + $0x50] sm:$0xff] %vm387, %v374
        %394 = vst.msk [vmem:[#allocation3 + $0x60] sm:$0xff] %vm387, %v376
        %395 = vst.msk [vmem:[#allocation3 + $0x70] sm:$0xff] %vm387, %v378
        %v396 = vld [vmem:[%s223 + $0x1] sm:$0xff]
        %v397 = vld [vmem:[%s223 + $0x11] sm:$0xff]
        %v398 = vld [vmem:[%s223 + $0x21] sm:$0xff]
        %v399 = vld [vmem:[%s223 + $0x31] sm:$0xff]
        %v400 = vld [vmem:[%s223 + $0x41] sm:$0xff]
        %v401 = vld [vmem:[%s223 + $0x51] sm:$0xff]
        %v402 = vld [vmem:[%s223 + $0x61] sm:$0xff]
        %v403 = vld [vmem:[%s223 + $0x71] sm:$0xff]
        %412 = vrot.lane.b32.xlu0 %v396, 64
        %v413 = vpop.permute.xlu0 %412
        %414 = vrot.lane.b32.xlu0 %v397, 64
        %v415 = vpop.permute.xlu0 %414
        %416 = vrot.lane.b32.xlu0 %v398, 64
        %v417 = vpop.permute.xlu0 %416
        %418 = vrot.lane.b32.xlu0 %v399, 64
        %v419 = vpop.permute.xlu0 %418
        %420 = vrot.lane.b32.xlu0 %v400, 64
        %v421 = vpop.permute.xlu0 %420
        %422 = vrot.lane.b32.xlu0 %v401, 64
        %v423 = vpop.permute.xlu0 %422
        %424 = vrot.lane.b32.xlu0 %v402, 64
        %v425 = vpop.permute.xlu0 %424
        %426 = vrot.lane.b32.xlu0 %v403, 64
        %v427 = vpop.permute.xlu0 %426
        %vm436 = vcmask 654848
        %437 = vst.msk [vmem:[#allocation3] sm:$0xff] %vm436, %v413
        %438 = vst.msk [vmem:[#allocation3 + $0x10] sm:$0xff] %vm436, %v415
        %439 = vst.msk [vmem:[#allocation3 + $0x20] sm:$0xff] %vm436, %v417
        %440 = vst.msk [vmem:[#allocation3 + $0x30] sm:$0xff] %vm436, %v419
        %441 = vst.msk [vmem:[#allocation3 + $0x40] sm:$0xff] %vm436, %v421
        %442 = vst.msk [vmem:[#allocation3 + $0x50] sm:$0xff] %vm436, %v423
        %443 = vst.msk [vmem:[#allocation3 + $0x60] sm:$0xff] %vm436, %v425
        %444 = vst.msk [vmem:[#allocation3 + $0x70] sm:$0xff] %vm436, %v427
        %v445 = vld [vmem:[%s223 + $0x2] sm:$0xff]
        %v446 = vld [vmem:[%s223 + $0x12] sm:$0xff]
        %v447 = vld [vmem:[%s223 + $0x22] sm:$0xff]
        %v448 = vld [vmem:[%s223 + $0x32] sm:$0xff]
        %v449 = vld [vmem:[%s223 + $0x42] sm:$0xff]
        %v450 = vld [vmem:[%s223 + $0x52] sm:$0xff]
        %v451 = vld [vmem:[%s223 + $0x62] sm:$0xff]
        %v452 = vld [vmem:[%s223 + $0x72] sm:$0xff]
        %461 = vrot.lane.b32.xlu0 %v445, 80
        %v462 = vpop.permute.xlu0 %461
        %463 = vrot.lane.b32.xlu0 %v446, 80
        %v464 = vpop.permute.xlu0 %463
        %465 = vrot.lane.b32.xlu0 %v447, 80
        %v466 = vpop.permute.xlu0 %465
        %467 = vrot.lane.b32.xlu0 %v448, 80
        %v468 = vpop.permute.xlu0 %467
        %469 = vrot.lane.b32.xlu0 %v449, 80
        %v470 = vpop.permute.xlu0 %469
        %471 = vrot.lane.b32.xlu0 %v450, 80
        %v472 = vpop.permute.xlu0 %471
        %473 = vrot.lane.b32.xlu0 %v451, 80
        %v474 = vpop.permute.xlu0 %473
        %475 = vrot.lane.b32.xlu0 %v452, 80
        %v476 = vpop.permute.xlu0 %475
        %vm485 = vcmask 786048
        %486 = vst.msk [vmem:[#allocation3] sm:$0xff] %vm485, %v462
        %487 = vst.msk [vmem:[#allocation3 + $0x10] sm:$0xff] %vm485, %v464
        %488 = vst.msk [vmem:[#allocation3 + $0x20] sm:$0xff] %vm485, %v466
        %489 = vst.msk [vmem:[#allocation3 + $0x30] sm:$0xff] %vm485, %v468
        %490 = vst.msk [vmem:[#allocation3 + $0x40] sm:$0xff] %vm485, %v470
        %491 = vst.msk [vmem:[#allocation3 + $0x50] sm:$0xff] %vm485, %v472
        %492 = vst.msk [vmem:[#allocation3 + $0x60] sm:$0xff] %vm485, %v474
        %493 = vst.msk [vmem:[#allocation3 + $0x70] sm:$0xff] %vm485, %v476
        %s494 = scalar_lea.vmem [#allocation2], 32
        %v495 = vld [vmem:[%s494] sm:$0xff]
        %v496 = vld [vmem:[%s494 + $0x10] sm:$0xff]
        %v497 = vld [vmem:[%s494 + $0x20] sm:$0xff]
        %v498 = vld [vmem:[%s494 + $0x30] sm:$0xff]
        %v499 = vld [vmem:[%s494 + $0x40] sm:$0xff]
        %v500 = vld [vmem:[%s494 + $0x50] sm:$0xff]
        %v501 = vld [vmem:[%s494 + $0x60] sm:$0xff]
        %v502 = vld [vmem:[%s494 + $0x70] sm:$0xff]
        %511 = vrot.lane.b32.xlu0 %v495, 96
        %v512 = vpop.permute.xlu0 %511
        %513 = vrot.lane.b32.xlu0 %v496, 96
        %v514 = vpop.permute.xlu0 %513
        %515 = vrot.lane.b32.xlu0 %v497, 96
        %v516 = vpop.permute.xlu0 %515
        %517 = vrot.lane.b32.xlu0 %v498, 96
        %v518 = vpop.permute.xlu0 %517
        %519 = vrot.lane.b32.xlu0 %v499, 96
        %v520 = vpop.permute.xlu0 %519
        %521 = vrot.lane.b32.xlu0 %v500, 96
        %v522 = vpop.permute.xlu0 %521
        %523 = vrot.lane.b32.xlu0 %v501, 96
        %v524 = vpop.permute.xlu0 %523
        %525 = vrot.lane.b32.xlu0 %v502, 96
        %v526 = vpop.permute.xlu0 %525
        %vm535 = vcmask 917248
        %536 = vst.msk [vmem:[#allocation3] sm:$0xff] %vm535, %v512
        %537 = vst.msk [vmem:[#allocation3 + $0x10] sm:$0xff] %vm535, %v514
        %538 = vst.msk [vmem:[#allocation3 + $0x20] sm:$0xff] %vm535, %v516
        %539 = vst.msk [vmem:[#allocation3 + $0x30] sm:$0xff] %vm535, %v518
        %540 = vst.msk [vmem:[#allocation3 + $0x40] sm:$0xff] %vm535, %v520
        %541 = vst.msk [vmem:[#allocation3 + $0x50] sm:$0xff] %vm535, %v522
        %542 = vst.msk [vmem:[#allocation3 + $0x60] sm:$0xff] %vm535, %v524
        %543 = vst.msk [vmem:[#allocation3 + $0x70] sm:$0xff] %vm535, %v526
        %v544 = vld [vmem:[%s494 + $0x1] sm:$0xff]
        %v545 = vld [vmem:[%s494 + $0x11] sm:$0xff]
        %v546 = vld [vmem:[%s494 + $0x21] sm:$0xff]
        %v547 = vld [vmem:[%s494 + $0x31] sm:$0xff]
        %v548 = vld [vmem:[%s494 + $0x41] sm:$0xff]
        %v549 = vld [vmem:[%s494 + $0x51] sm:$0xff]
        %v550 = vld [vmem:[%s494 + $0x61] sm:$0xff]
        %v551 = vld [vmem:[%s494 + $0x71] sm:$0xff]
        %560 = vrot.lane.b32.xlu0 %v544, 112
        %v561 = vpop.permute.xlu0 %560
        %562 = vrot.lane.b32.xlu0 %v545, 112
        %v563 = vpop.permute.xlu0 %562
        %564 = vrot.lane.b32.xlu0 %v546, 112
        %v565 = vpop.permute.xlu0 %564
        %566 = vrot.lane.b32.xlu0 %v547, 112
        %v567 = vpop.permute.xlu0 %566
        %568 = vrot.lane.b32.xlu0 %v548, 112
        %v569 = vpop.permute.xlu0 %568
        %570 = vrot.lane.b32.xlu0 %v549, 112
        %v571 = vpop.permute.xlu0 %570
        %572 = vrot.lane.b32.xlu0 %v550, 112
        %v573 = vpop.permute.xlu0 %572
        %574 = vrot.lane.b32.xlu0 %v551, 112
        %v575 = vpop.permute.xlu0 %574
        %vm584 = vcmask 1048448
        %585 = vst.msk [vmem:[#allocation3] sm:$0xff] %vm584, %v561
        %586 = vst.msk [vmem:[#allocation3 + $0x10] sm:$0xff] %vm584, %v563
        %587 = vst.msk [vmem:[#allocation3 + $0x20] sm:$0xff] %vm584, %v565
        %588 = vst.msk [vmem:[#allocation3 + $0x30] sm:$0xff] %vm584, %v567
        %589 = vst.msk [vmem:[#allocation3 + $0x40] sm:$0xff] %vm584, %v569
        %590 = vst.msk [vmem:[#allocation3 + $0x50] sm:$0xff] %vm584, %v571
        %591 = vst.msk [vmem:[#allocation3 + $0x60] sm:$0xff] %vm584, %v573
        %592 = vst.msk [vmem:[#allocation3 + $0x70] sm:$0xff] %vm584, %v575
        %v593 = vld [vmem:[%s494 + $0x2] sm:$0xff]
        %v594 = vld [vmem:[%s494 + $0x12] sm:$0xff]
        %v595 = vld [vmem:[%s494 + $0x22] sm:$0xff]
        %v596 = vld [vmem:[%s494 + $0x32] sm:$0xff]
        %v597 = vld [vmem:[%s494 + $0x42] sm:$0xff]
        %v598 = vld [vmem:[%s494 + $0x52] sm:$0xff]
        %v599 = vld [vmem:[%s494 + $0x62] sm:$0xff]
        %v600 = vld [vmem:[%s494 + $0x72] sm:$0xff]
        %601 = vst.msk [vmem:[#allocation3 + $0x8] sm:$0xff] %vm224, %v593
        %602 = vst.msk [vmem:[#allocation3 + $0x18] sm:$0xff] %vm224, %v594
        %603 = vst.msk [vmem:[#allocation3 + $0x28] sm:$0xff] %vm224, %v595
        %604 = vst.msk [vmem:[#allocation3 + $0x38] sm:$0xff] %vm224, %v596
        %605 = vst.msk [vmem:[#allocation3 + $0x48] sm:$0xff] %vm224, %v597
        %606 = vst.msk [vmem:[#allocation3 + $0x58] sm:$0xff] %vm224, %v598
        %607 = vst.msk [vmem:[#allocation3 + $0x68] sm:$0xff] %vm224, %v599
        %608 = vst.msk [vmem:[#allocation3 + $0x78] sm:$0xff] %vm224, %v600
        %v609 = vld [vmem:[%s1] sm:$0xff]
        %v610 = vld [vmem:[#allocation3] sm:$0xff]
        %v611 = vld [vmem:[#allocation3 + $0x8] sm:$0xff]
        %v612 = vld [vmem:[#allocation3 + $0x10] sm:$0xff]
        %v613 = vld [vmem:[#allocation3 + $0x18] sm:$0xff]
        %v614 = vld [vmem:[#allocation3 + $0x20] sm:$0xff]
        %v615 = vld [vmem:[#allocation3 + $0x28] sm:$0xff]
        %v616 = vld [vmem:[#allocation3 + $0x30] sm:$0xff]
        %v617 = vld [vmem:[#allocation3 + $0x38] sm:$0xff]
        %v618 = vld [vmem:[#allocation3 + $0x40] sm:$0xff]
        %v619 = vld [vmem:[#allocation3 + $0x48] sm:$0xff]
        %v620 = vld [vmem:[#allocation3 + $0x50] sm:$0xff]
        %v621 = vld [vmem:[#allocation3 + $0x58] sm:$0xff]
        %v622 = vld [vmem:[#allocation3 + $0x60] sm:$0xff]
        %v623 = vld [vmem:[#allocation3 + $0x68] sm:$0xff]
        %v624 = vld [vmem:[#allocation3 + $0x70] sm:$0xff]
        %v625 = vld [vmem:[#allocation3 + $0x78] sm:$0xff]
        %v626 = vld [vmem:[%s2] sm:$0xf]
        %628 = vset.pattern.permute.xlu0 0
        %629 = vperm.xlu0 %628, %v626
        %v630 = vpop.permute.xlu0 %629
        %v633 = vcombine.high %v609, %v609
        %v634 = vsel %vm224, %v633, 0
        %v637 = vsel %vm224, %v611, 0
        %v640 = vsel %vm224, %v613, 0
        %v643 = vsel %vm224, %v615, 0
        %v646 = vsel %vm224, %v617, 0
        %v649 = vsel %vm224, %v619, 0
        %v652 = vsel %vm224, %v621, 0
        %v655 = vsel %vm224, %v623, 0
        %v658 = vsel %vm224, %v625, 0
        %660 = vmatprep.subr.mxu0 %v637
        %661 = vmatpush1.xpose.msra.mxu0 %v610
        %662 = vmatprep.subr.mxu0 %v640
        %663 = vmatpush1.xpose.msra.mxu0 %v612
        %664 = vmatprep.subr.mxu0 %v643
        %665 = vmatpush1.xpose.msra.mxu0 %v614
        %666 = vmatprep.subr.mxu0 %v646
        %667 = vmatpush1.xpose.msra.mxu0 %v616
        %668 = vmatprep.subr.mxu0 %v649
        %669 = vmatpush1.xpose.msra.mxu0 %v618
        %670 = vmatprep.subr.mxu0 %v652
        %671 = vmatpush1.xpose.msra.mxu0 %v620
        %672 = vmatprep.subr.mxu0 %v655
        %673 = vmatpush1.xpose.msra.mxu0 %v622
        %674 = vmatprep.subr.mxu0 %v658
        %675 = vmatpush1.xpose.msra.mxu0 %v624
        %676 = vmatprep.subr.mxu0 0.0
        %677 = vmatpush1.xpose.msra.mxu0 0.0
        %678 = vmatprep.subr.mxu0 0.0
        %679 = vmatpush1.xpose.msra.mxu0 0.0
        %680 = vmatprep.subr.mxu0 0.0
        %681 = vmatpush1.xpose.msra.mxu0 0.0
        %682 = vmatprep.subr.mxu0 0.0
        %683 = vmatpush1.xpose.msra.mxu0 0.0
        %684 = vmatprep.subr.mxu0 0.0
        %685 = vmatpush1.xpose.msra.mxu0 0.0
        %686 = vmatprep.subr.mxu0 0.0
        %687 = vmatpush1.xpose.msra.mxu0 0.0
        %688 = vmatprep.subr.mxu0 0.0
        %689 = vmatpush1.xpose.msra.mxu0 0.0
        %690 = vmatprep.subr.mxu0 0.0
        %691 = vmatpush1.xpose.msra.mxu0 0.0
        %692 = vmatprep.subr.mxu0 0.0
        %693 = vmatpush1.xpose.msra.mxu0 0.0
        %694 = vmatprep.subr.mxu0 0.0
        %695 = vmatpush1.xpose.msra.mxu0 0.0
        %696 = vmatprep.subr.mxu0 0.0
        %697 = vmatpush1.xpose.msra.mxu0 0.0
        %698 = vmatprep.subr.mxu0 0.0
        %699 = vmatpush1.xpose.msra.mxu0 0.0
        %700 = vmatprep.subr.mxu0 0.0
        %701 = vmatpush1.xpose.msra.mxu0 0.0
        %702 = vmatprep.subr.mxu0 0.0
        %703 = vmatpush1.xpose.msra.mxu0 0.0
        %704 = vmatprep.subr.mxu0 0.0
        %705 = vmatpush1.xpose.msra.mxu0 0.0
        %706 = vmatprep.subr.mxu0 0.0
        %707 = vmatpush1.xpose.msra.mxu0 0.0
        %708 = vmatprep.subr.mxu0 0.0
        %709 = vmatpush1.xpose.msra.mxu0 0.0
        %710 = vmatprep.subr.mxu0 0.0
        %711 = vmatpush1.xpose.msra.mxu0 0.0
        %712 = vmatprep.subr.mxu0 0.0
        %713 = vmatpush1.xpose.msra.mxu0 0.0
        %714 = vmatprep.subr.mxu0 0.0
        %715 = vmatpush1.xpose.msra.mxu0 0.0
        %716 = vmatprep.subr.mxu0 0.0
        %717 = vmatpush1.xpose.msra.mxu0 0.0
        %718 = vmatprep.subr.mxu0 0.0
        %719 = vmatpush1.xpose.msra.mxu0 0.0
        %720 = vmatprep.subr.mxu0 0.0
        %721 = vmatpush1.xpose.msra.mxu0 0.0
        %722 = vmatprep.subr.mxu0 0.0
        %723 = vmatpush1.xpose.msra.mxu0 0.0
        %724 = vmatprep.mubr.f32.mxu0 %v634
        %725 = vmatmul.mubr.f32.gmra.mrb[0].mxu0 %v609
        %v726 = vpop.f32.mrb[0].mxu0
        %v727 = vadd.f32 %v630, %v726
        %v728 = vpop.f32.mrb[0].mxu0
        %729 = vdwg.mxu0
        %vm730 = vcmask 519168
        %731 = vst.msk [vmem:[%s188] sm:$0xf] %vm730, %v727
        %s732 = sand.u32 %s96, 1
        %s733 = scalar_lea.sflag [#allocation6], %s732
        %s734 = sand.u32 %s96, 1
        %s735 = smul.addr %s734, 4
        %s736 = scalar_lea.vmem [#allocation7], %s735
        // Predicated region
        $region41: #{tpu_custom_call.1} parent=31 // pred_check
          %p737 = pneg %p106
        $region42: #{tpu_custom_call.1} parent=31 // pred_check_branch
          %739 = sbr.rel (%p737) target = $region44
        $region43: #{tpu_custom_call.1} parent=31 // pred_region
          %s741 = ssub.s32 64, 64
          %742 = vsyncadd %s733, %s741
          %s743 = smul.addr %s20, 64
          %s744 = scalar_lea.hbm %s3, %s743
          %s746 = sshll.u32 %s736, 4
          %s747 = int_to_ptr.vmem [resolvable:$true] %s746
          %749 = dma.vmem_to_hbm [thread:$0]  %s747, 64, %s744, %s733
        $region44: #{tpu_custom_call.1} parent=31 // pred_fallthru
          _
      $region32: #{tpu_custom_call.1} parent=5 // pred_fallthru
        _
      %p750 = scmp.le.s32.totalorder 2, %s15
      // Predicated region
      $region45: #{tpu_custom_call.1} parent=5 // pred_check
        %p751 = pneg %p750
      $region46: #{tpu_custom_call.1} parent=5 // pred_check_branch
        %753 = sbr.rel (%p751) target = $region48
      $region47: #{tpu_custom_call.1} parent=5 // pred_region
        %s754 = ssub.s32 %s15, 2
        // Predicated region
        $region49: #{tpu_custom_call.1} parent=47 // pred_check
          %p755 = pneg %p112
        $region50: #{tpu_custom_call.1} parent=47 // pred_check_branch
          %757 = sbr.rel (%p755) target = $region52
        $region51: #{tpu_custom_call.1} parent=47 // pred_region
          %s758 = sand.u32 %s97, 1
          %s759 = scalar_lea.sflag [#allocation6], %s758
          %s760 = sand.u32 %s97, 1
          %s761 = smul.addr %s760, 4
          %s762 = scalar_lea.vmem [#allocation7], %s761
          %763 = dma.done %s759, 64
        $region52: #{tpu_custom_call.1} parent=47 // pred_fallthru
          _
      $region48: #{tpu_custom_call.1} parent=5 // pred_fallthru
        _
    $region6: #{tpu_custom_call.1} parent=1 // loop_footer
      %s19 = sadd.s32 1, %s15
    $region7: #{tpu_custom_call.1} parent=1 // loop_footer_branch
      %14 = sbr.rel target = $region3
    $region8: #{tpu_custom_call.1} parent=1 // loop_exit
      _
    %764 = vsyncpa [#allocation5], 1
    %s765 = scalar_lea.sflag [#allocation5], 1
    %766 = vsyncpa %s765, 1
    %767 = vsyncpa [#allocation6], 1
    %s768 = scalar_lea.sflag [#allocation6], 1
    %769 = vsyncpa %s768, 1

</llo_original>
